<compile_context>
chip_gen: v7x
topology: tpu7x:2x2x1
jax: 0.10.0
libtpu: 0.0.40
codegen_flags: <defaults>
</compile_context>

<pallas_src>
import functools

import jax
import jax.numpy as jnp
from jax.experimental import pallas as pl
from jax.experimental.pallas import tpu as pltpu

HIDDEN1 = 128
HIDDEN2 = 64


def _round_up(x, m):
    return ((x + m - 1) // m) * m


def _cdiv(a, b):
    return (a + b - 1) // b


def _mlp_kernel(x_ref, w1_ref, b1_ref, w2_ref, b2_ref, w3_ref, b3_ref, o_ref):
    # Layer 1: Linear(in_dim, 128) + ReLU  (bf16 MXU matmul, f32 accumulate)
    x = x_ref[...].astype(jnp.bfloat16)
    h1 = jnp.dot(x, w1_ref[...], preferred_element_type=jnp.float32)
    h1 = jnp.maximum(h1 + b1_ref[...], 0.0)
    # Dropout(0.5): identity at inference time.
    # Layer 2: Linear(128, 64) + ReLU
    h2 = jnp.dot(h1.astype(jnp.bfloat16), w2_ref[...],
                 preferred_element_type=jnp.float32)
    h2 = jnp.maximum(h2 + b2_ref[...], 0.0)
    # Layer 3: Linear(64, out_dim) in f32 (tiny, kept full precision).
    out = jnp.dot(h2, w3_ref[...], preferred_element_type=jnp.float32)
    o_ref[...] = (out + b3_ref[...]).astype(o_ref.dtype)


@functools.partial(jax.jit, static_argnames=("tb",))
def motor_fault_nn_forward(x, params, *, tb=4096):
    """Fused forward pass. x: (B, input_dim) float32. Returns (B, output_dim) float32."""
    w1, b1, w2, b2, w3, b3 = params          # w: (in, out); b: (out,) or (1, out)
    B, in_dim = x.shape
    out_dim = w3.shape[1]

    # ---- dtype prep (no lane padding anywhere) ------------------------------
    x = x.astype(jnp.float32)
    w1 = w1.astype(jnp.bfloat16)
    w2 = w2.astype(jnp.bfloat16)
    w3 = w3.astype(jnp.float32)
    b1 = jnp.asarray(b1, jnp.float32).reshape(1, HIDDEN1)
    b2 = jnp.asarray(b2, jnp.float32).reshape(1, HIDDEN2)
    b3 = jnp.asarray(b3, jnp.float32).reshape(1, out_dim)

    # ---- batch tiling (megacore-aware) --------------------------------------
    tb_req = max(8, min(tb, _round_up(B, 8)))
    min_steps = 2 if B > 16 else 1            # keep both v7x TensorCores busy
    n_steps = max(_cdiv(B, tb_req), min_steps)
    if n_steps == 1:
        tb_eff, b_pad = B, B                  # full-dim block: works for any B, no pad
    else:
        tb_eff = _round_up(_cdiv(B, n_steps), 8)
        b_pad = tb_eff * n_steps
    if b_pad != B:                            # zero row-padding only in the ragged case
        x = jnp.pad(x, ((0, b_pad - B), (0, 0)))

    # ---- cost hint for the XLA scheduler ------------------------------------
    flops = 2 * b_pad * (in_dim * HIDDEN1 + HIDDEN1 * HIDDEN2 + HIDDEN2 * out_dim)
    bytes_accessed = (
        b_pad * in_dim * 4 + b_pad * out_dim * 4
        + (w1.size + w2.size) * 2 + w3.size * 4
        + (b1.size + b2.size + b3.size) * 4)
    cost = pl.CostEstimate(flops=flops, transcendentals=0,
                           bytes_accessed=bytes_accessed)

    # x/out tiled along batch; weights/biases resident (constant index_map).
    x_spec = pl.BlockSpec((tb_eff, in_dim), lambda i: (i, 0))
    out_spec = pl.BlockSpec((tb_eff, out_dim), lambda i: (i, 0))
    resident = lambda a: pl.BlockSpec(a.shape, lambda i: (0,) * a.ndim)

    out = pl.pallas_call(
        _mlp_kernel,
        out_shape=jax.ShapeDtypeStruct((b_pad, out_dim), jnp.float32),
        grid=(n_steps,),
        in_specs=[
            x_spec,
            resident(w1), resident(b1),
            resident(w2), resident(b2),
            resident(w3), resident(b3),
        ],
        out_specs=out_spec,
        compiler_params=pltpu.CompilerParams(
            dimension_semantics=("parallel",)),
        cost_estimate=cost,
    )(x, w1, b1, w2, b2, w3, b3)

    return out[:B] if b_pad != B else out


def init_params(key, input_dim, output_dim):
    """Deterministic synthetic init (uniform, PyTorch-Linear-like fan-in scaling).

    Weights stored as (in_features, out_features), i.e. pre-transposed relative to
    torch.nn.Linear's (out, in) storage.
    """
    ks = jax.random.split(key, 6)

    def lin(kw, kb, fan_in, fan_out):
        bound = 1.0 / jnp.sqrt(fan_in)
        w = jax.random.uniform(kw, (fan_in, fan_out), jnp.float32, -bound, bound)
        b = jax.random.uniform(kb, (1, fan_out), jnp.float32, -bound, bound)
        return w, b

    w1, b1 = lin(ks[0], ks[1], input_dim, HIDDEN1)
    w2, b2 = lin(ks[2], ks[3], HIDDEN1, HIDDEN2)
    w3, b3 = lin(ks[4], ks[5], HIDDEN2, output_dim)
    return (w1, b1, w2, b2, w3, b3)


def reference_forward(x, params):
    w1, b1, w2, b2, w3, b3 = params
    h1 = jnp.maximum(x @ w1 + b1.reshape(1, -1), 0.0)
    h2 = jnp.maximum(h1 @ w2 + b2.reshape(1, -1), 0.0)
    return h2 @ w3 + b3.reshape(1, -1)


if __name__ == "__main__":
    input_dim = 32
    output_dim = 8
    batch = 8

    key = jax.random.PRNGKey(0)
    kx, kp = jax.random.split(key)
    x = jax.random.normal(kx, (batch, input_dim), jnp.float32)
    params = init_params(kp, input_dim, output_dim)

    out = motor_fault_nn_forward(x, params)
    out = jax.block_until_ready(out)

    ref = reference_forward(x, params)
    assert out.shape == (batch, output_dim)
    # bf16 activations/weights in layers 1-2 with f32 accumulation -> relaxed tolerance.
    assert jnp.allclose(out, ref, atol=5e-2, rtol=5e-2), "mismatch vs reference"

    print("KERNEL_OK")
</pallas_src>

<mosaic_0001>
module attributes {stable_mosaic.version = 11 : i64} {
  func.func @_mlp_kernel(%arg0: i32, %arg1: memref<8x32xf32, #tpu.memory_space<vmem>>, %arg2: memref<32x128xbf16, #tpu.memory_space<vmem>>, %arg3: memref<1x128xf32, #tpu.memory_space<vmem>>, %arg4: memref<128x64xbf16, #tpu.memory_space<vmem>>, %arg5: memref<1x64xf32, #tpu.memory_space<vmem>>, %arg6: memref<64x8xf32, #tpu.memory_space<vmem>>, %arg7: memref<1x8xf32, #tpu.memory_space<vmem>>, %arg8: memref<8x8xf32, #tpu.memory_space<vmem>>) attributes {dimension_semantics = [#tpu.dimension_semantics<parallel>], iteration_bounds = array<i64: 1>, scalar_prefetch = 0 : i64, scratch_operands = 0 : i64, tpu.core_type = #tpu.core_type<tc>, window_params = [{transform_indices = @transform_0, window_bounds = array<i64: 8, 32>}, {pipeline_mode = #tpu.pipeline_mode<synchronous>, transform_indices = @transform_1, window_bounds = array<i64: 32, 128>}, {pipeline_mode = #tpu.pipeline_mode<synchronous>, transform_indices = @transform_2, window_bounds = array<i64: 1, 128>}, {pipeline_mode = #tpu.pipeline_mode<synchronous>, transform_indices = @transform_3, window_bounds = array<i64: 128, 64>}, {pipeline_mode = #tpu.pipeline_mode<synchronous>, transform_indices = @transform_4, window_bounds = array<i64: 1, 64>}, {pipeline_mode = #tpu.pipeline_mode<synchronous>, transform_indices = @transform_5, window_bounds = array<i64: 64, 8>}, {pipeline_mode = #tpu.pipeline_mode<synchronous>, transform_indices = @transform_6, window_bounds = array<i64: 1, 8>}, {transform_indices = @transform_7, window_bounds = array<i64: 8, 8>}]} {
    %c0 = arith.constant 0 : index
    %c0_0 = arith.constant 0 : index
    %0 = vector.load %arg1[%c0, %c0_0] : memref<8x32xf32, #tpu.memory_space<vmem>>, vector<8x32xf32>
    %1 = arith.truncf %0 : vector<8x32xf32> to vector<8x32xbf16>
    %c0_1 = arith.constant 0 : index
    %c0_2 = arith.constant 0 : index
    %2 = vector.load %arg2[%c0_1, %c0_2] : memref<32x128xbf16, #tpu.memory_space<vmem>>, vector<32x128xbf16>
    %cst = arith.constant dense<0.000000e+00> : vector<8x128xf32>
    %3 = tpu.matmul %1, %2, %cst {dimension_numbers = #tpu.dot_dimension_numbers<[1], [0], [0], [1], [0, 0, 1, 1], [], []>} : vector<8x32xbf16>, vector<32x128xbf16>, vector<8x128xf32> -> vector<8x128xf32>
    %c0_3 = arith.constant 0 : index
    %c0_4 = arith.constant 0 : index
    %4 = vector.load %arg3[%c0_3, %c0_4] : memref<1x128xf32, #tpu.memory_space<vmem>>, vector<1x128xf32>
    %5 = vector.broadcast %4 : vector<1x128xf32> to vector<8x128xf32>
    %6 = arith.addf %3, %5 : vector<8x128xf32>
    %cst_5 = arith.constant 0.000000e+00 : f32
    %7 = vector.broadcast %cst_5 : f32 to vector<8x128xf32>
    %8 = arith.maximumf %6, %7 : vector<8x128xf32>
    %9 = arith.truncf %8 : vector<8x128xf32> to vector<8x128xbf16>
    %c0_6 = arith.constant 0 : index
    %c0_7 = arith.constant 0 : index
    %10 = vector.load %arg4[%c0_6, %c0_7] : memref<128x64xbf16, #tpu.memory_space<vmem>>, vector<128x64xbf16>
    %cst_8 = arith.constant dense<0.000000e+00> : vector<8x64xf32>
    %11 = tpu.matmul %9, %10, %cst_8 {dimension_numbers = #tpu.dot_dimension_numbers<[1], [0], [0], [1], [0, 0, 1, 1], [], []>} : vector<8x128xbf16>, vector<128x64xbf16>, vector<8x64xf32> -> vector<8x64xf32>
    %c0_9 = arith.constant 0 : index
    %c0_10 = arith.constant 0 : index
    %12 = vector.load %arg5[%c0_9, %c0_10] : memref<1x64xf32, #tpu.memory_space<vmem>>, vector<1x64xf32>
    %13 = vector.broadcast %12 : vector<1x64xf32> to vector<8x64xf32>
    %14 = arith.addf %11, %13 : vector<8x64xf32>
    %cst_11 = arith.constant 0.000000e+00 : f32
    %15 = vector.broadcast %cst_11 : f32 to vector<8x64xf32>
    %16 = arith.maximumf %14, %15 : vector<8x64xf32>
    %c0_12 = arith.constant 0 : index
    %c0_13 = arith.constant 0 : index
    %17 = vector.load %arg6[%c0_12, %c0_13] : memref<64x8xf32, #tpu.memory_space<vmem>>, vector<64x8xf32>
    %cst_14 = arith.constant dense<0.000000e+00> : vector<8x8xf32>
    %18 = tpu.matmul %16, %17, %cst_14 {dimension_numbers = #tpu.dot_dimension_numbers<[1], [0], [0], [1], [0, 0, 1, 1], [], []>} : vector<8x64xf32>, vector<64x8xf32>, vector<8x8xf32> -> vector<8x8xf32>
    %c0_15 = arith.constant 0 : index
    %c0_16 = arith.constant 0 : index
    %19 = vector.load %arg7[%c0_15, %c0_16] : memref<1x8xf32, #tpu.memory_space<vmem>>, vector<1x8xf32>
    %20 = vector.broadcast %19 : vector<1x8xf32> to vector<8x8xf32>
    %21 = arith.addf %18, %20 : vector<8x8xf32>
    %c0_17 = arith.constant 0 : index
    %c0_18 = arith.constant 0 : index
    %22 = vector.load %arg8[%c0_17, %c0_18] : memref<8x8xf32, #tpu.memory_space<vmem>>, vector<8x8xf32>
    tpu.vector_store %arg8[%c0_17, %c0_18], %21 {strides = array<i32>} : memref<8x8xf32, #tpu.memory_space<vmem>>, vector<8x8xf32>,
    return
  }
  func.func @transform_0(%arg0: i32) -> (i32, i32) {
    %c0_i32 = arith.constant 0 : i32
    %c0_i32_0 = arith.constant 0 : i32
    return %arg0, %c0_i32 : i32, i32
  }
  func.func @transform_1(%arg0: i32) -> (i32, i32) {
    %c0_i32 = arith.constant 0 : i32
    %c0_i32_0 = arith.constant 0 : i32
    %c0_i32_1 = arith.constant 0 : i32
    return %c0_i32, %c0_i32_0 : i32, i32
  }
  func.func @transform_2(%arg0: i32) -> (i32, i32) {
    %c0_i32 = arith.constant 0 : i32
    %c0_i32_0 = arith.constant 0 : i32
    %c0_i32_1 = arith.constant 0 : i32
    return %c0_i32, %c0_i32_0 : i32, i32
  }
  func.func @transform_3(%arg0: i32) -> (i32, i32) {
    %c0_i32 = arith.constant 0 : i32
    %c0_i32_0 = arith.constant 0 : i32
    %c0_i32_1 = arith.constant 0 : i32
    return %c0_i32, %c0_i32_0 : i32, i32
  }
  func.func @transform_4(%arg0: i32) -> (i32, i32) {
    %c0_i32 = arith.constant 0 : i32
    %c0_i32_0 = arith.constant 0 : i32
    %c0_i32_1 = arith.constant 0 : i32
    return %c0_i32, %c0_i32_0 : i32, i32
  }
  func.func @transform_5(%arg0: i32) -> (i32, i32) {
    %c0_i32 = arith.constant 0 : i32
    %c0_i32_0 = arith.constant 0 : i32
    %c0_i32_1 = arith.constant 0 : i32
    return %c0_i32, %c0_i32_0 : i32, i32
  }
  func.func @transform_6(%arg0: i32) -> (i32, i32) {
    %c0_i32 = arith.constant 0 : i32
    %c0_i32_0 = arith.constant 0 : i32
    %c0_i32_1 = arith.constant 0 : i32
    return %c0_i32, %c0_i32_0 : i32, i32
  }
  func.func @transform_7(%arg0: i32) -> (i32, i32) {
    %c0_i32 = arith.constant 0 : i32
    %c0_i32_0 = arith.constant 0 : i32
    return %arg0, %c0_i32 : i32, i32
  }
}

</mosaic_0001>

<llo_original>
// kernel: motor_fault_nn_forward.1
$region0: #{motor_fault_nn_forward.1}
  #allocation0 [shape = 'u32[]', space=smem, size = 0x4, offset = 0x4, fixed_abs, tag = 'smem constant byte address 0x4 - core index']
  #allocation1 [shape = 'u32[144,128]{1,0:T(1,128)}', space=vmem, size = 0x12000, scoped, tag = 'internal scratch']
  %s0 = inlined_call_operand.vmem [shape: f32[8,32], index: 0, kind: input, shape index: {}]
  %s1 = inlined_call_operand.vmem [shape: bf16[32,128], index: 1, kind: input, shape index: {}]
  %s2 = inlined_call_operand.vmem [shape: f32[1,128], index: 2, kind: input, shape index: {}]
  %s3 = inlined_call_operand.vmem [shape: bf16[128,64], index: 3, kind: input, shape index: {}]
  %s4 = inlined_call_operand.vmem [shape: f32[1,64], index: 4, kind: input, shape index: {}]
  %s5 = inlined_call_operand.vmem [shape: f32[64,8], index: 5, kind: input, shape index: {}]
  %s6 = inlined_call_operand.vmem [shape: f32[1,8], index: 6, kind: input, shape index: {}]
  %s7 = inlined_call_operand.hbm [shape: f32[8,8], index: 7, kind: output, shape index: {}]
  %s8 = sld [smem:[#allocation0]]
  $region38: #{motor_fault_nn_forward.1} parent=0
    _
  %s10 = ssub.s32 1, %s8
  %s11 = scalar_select 0, %s10, %s8
  $region1: #{motor_fault_nn_forward.1} parent=0
    #allocation2 [shape = 'u8[4096]{0}', space=vmem, size = 0x1000, scoped, tag = 'output window, operand 0, single buffered']
    #allocation3 [shape = 's32[1]{0}', space=sflag, size = 0x4, scoped, tag = 'scoped memory for motor_fault_nn_forward.1']
    %12 = vsyncpa [#allocation3], 0
    // Predicated region
    $region2: #{motor_fault_nn_forward.1} parent=1 // pred_check
      _
    $region3: #{motor_fault_nn_forward.1} parent=1 // pred_check_branch
      %14 = sbr.rel (0) target = $region5
    $region4: #{motor_fault_nn_forward.1} parent=1 // pred_region
      _
    $region5: #{motor_fault_nn_forward.1} parent=1 // pred_fallthru
      _
    // Predicated region
    $region6: #{motor_fault_nn_forward.1} parent=1 // pred_check
      _
    $region7: #{motor_fault_nn_forward.1} parent=1 // pred_check_branch
      %16 = sbr.rel (0) target = $region9
    $region8: #{motor_fault_nn_forward.1} parent=1 // pred_region
      _
    $region9: #{motor_fault_nn_forward.1} parent=1 // pred_fallthru
      _
    // Predicated region
    $region10: #{motor_fault_nn_forward.1} parent=1 // pred_check
      _
    $region11: #{motor_fault_nn_forward.1} parent=1 // pred_check_branch
      %18 = sbr.rel (0) target = $region13
    $region12: #{motor_fault_nn_forward.1} parent=1 // pred_region
      _
    $region13: #{motor_fault_nn_forward.1} parent=1 // pred_fallthru
      _
    // Predicated region
    $region14: #{motor_fault_nn_forward.1} parent=1 // pred_check
      _
    $region15: #{motor_fault_nn_forward.1} parent=1 // pred_check_branch
      %20 = sbr.rel (0) target = $region17
    $region16: #{motor_fault_nn_forward.1} parent=1 // pred_region
      _
    $region17: #{motor_fault_nn_forward.1} parent=1 // pred_fallthru
      _
    // Predicated region
    $region18: #{motor_fault_nn_forward.1} parent=1 // pred_check
      _
    $region19: #{motor_fault_nn_forward.1} parent=1 // pred_check_branch
      %22 = sbr.rel (0) target = $region21
    $region20: #{motor_fault_nn_forward.1} parent=1 // pred_region
      _
    $region21: #{motor_fault_nn_forward.1} parent=1 // pred_fallthru
      _
    // Predicated region
    $region22: #{motor_fault_nn_forward.1} parent=1 // pred_check
      _
    $region23: #{motor_fault_nn_forward.1} parent=1 // pred_check_branch
      %24 = sbr.rel (0) target = $region25
    $region24: #{motor_fault_nn_forward.1} parent=1 // pred_region
      _
    $region25: #{motor_fault_nn_forward.1} parent=1 // pred_fallthru
      _
    // Predicated region
    $region26: #{motor_fault_nn_forward.1} parent=1 // pred_check
      _
    $region27: #{motor_fault_nn_forward.1} parent=1 // pred_check_branch
      %26 = sbr.rel (0) target = $region29
    $region28: #{motor_fault_nn_forward.1} parent=1 // pred_region
      _
    $region29: #{motor_fault_nn_forward.1} parent=1 // pred_fallthru
      _
    %v28 = vld [vmem:[%s0] sm:$0xff]
    %v29 = vpack.c.bf16 %v28, %v28
    %v30 = vld [vmem:[%s1] sm:$0xf]
    %v31 = vld [vmem:[%s1 + $0x4] sm:$0xf]
    %v32 = vld [vmem:[%s1 + $0x8] sm:$0xf]
    %v33 = vld [vmem:[%s1 + $0xc] sm:$0xf]
    %v34 = vld [vmem:[%s2] sm:$0x1]
    %v36 = vlaneseq
    %v37 = vshrl.u32 %v36, 7
    %v38 = vsub.s32 0, %v37
    %v39 = vrot.slane %v34, %v38
    %v45 = vunpack.c.l.b16 %v30
    %v46 = vunpack.c.l.b16 %v31
    %v47 = vunpack.c.l.b16 %v32
    %v48 = vunpack.c.l.b16 %v33
    %v49 = vpack.c.b16 %v46, %v45
    %v50 = vpack.c.b16 %v48, %v47
    %vm53 = vcmask 261120
    %v55 = vsel %vm53, %v29, 0
    %57 = vmatprep.subr.bf16.mxu0 0
    %58 = vmatpush1.bf16.msra.mxu0 %v49
    %59 = vmatprep.subr.bf16.mxu0 0
    %60 = vmatpush1.bf16.msra.mxu0 %v50
    %61 = vmatprep.subr.bf16.mxu0 0
    %62 = vmatpush1.bf16.msra.mxu0 0
    %63 = vmatprep.subr.bf16.mxu0 0
    %64 = vmatpush1.bf16.msra.mxu0 0
    %65 = vmatprep.subr.bf16.mxu0 0
    %66 = vmatpush1.bf16.msra.mxu0 0
    %67 = vmatprep.subr.bf16.mxu0 0
    %68 = vmatpush1.bf16.msra.mxu0 0
    %69 = vmatprep.subr.bf16.mxu0 0
    %70 = vmatpush1.bf16.msra.mxu0 0
    %71 = vmatprep.subr.bf16.mxu0 0
    %72 = vmatpush1.bf16.msra.mxu0 0
    %73 = vmatprep.subr.bf16.mxu0 0
    %74 = vmatpush1.bf16.msra.mxu0 0
    %75 = vmatprep.subr.bf16.mxu0 0
    %76 = vmatpush1.bf16.msra.mxu0 0
    %77 = vmatprep.subr.bf16.mxu0 0
    %78 = vmatpush1.bf16.msra.mxu0 0
    %79 = vmatprep.subr.bf16.mxu0 0
    %80 = vmatpush1.bf16.msra.mxu0 0
    %81 = vmatprep.subr.bf16.mxu0 0
    %82 = vmatpush1.bf16.msra.mxu0 0
    %83 = vmatprep.subr.bf16.mxu0 0
    %84 = vmatpush1.bf16.msra.mxu0 0
    %85 = vmatprep.subr.bf16.mxu0 0
    %86 = vmatpush1.bf16.msra.mxu0 0
    %87 = vmatprep.subr.bf16.mxu0 0
    %88 = vmatpush1.bf16.msra.mxu0 0
    %89 = vmatprep.mubr.bf16.mxu0 0
    %90 = vmatmul.mubr.bf16.gmra.mrb[0].mxu0 %v55
    %v91 = vpop.f32.mrb[0].mxu0
    %v92 = vadd.f32 %v39, %v91
    %v93 = vpop.f32.mrb[0].mxu0
    %v94 = vpop.f32.mrb[0].mxu0
    %v95 = vpop.f32.mrb[0].mxu0
    %96 = vdwg.mxu0
    %v97 = vmax.f32 %v92, 0.0
    %v98 = vpack.c.bf16 %v97, %v97
    %v99 = vld [vmem:[%s3] sm:$0xf]
    %v100 = vld [vmem:[%s3 + $0x4] sm:$0xf]
    %v101 = vld [vmem:[%s3 + $0x8] sm:$0xf]
    %v102 = vld [vmem:[%s3 + $0xc] sm:$0xf]
    %v103 = vld [vmem:[%s3 + $0x10] sm:$0xf]
    %v104 = vld [vmem:[%s3 + $0x14] sm:$0xf]
    %v105 = vld [vmem:[%s3 + $0x18] sm:$0xf]
    %v106 = vld [vmem:[%s3 + $0x1c] sm:$0xf]
    %v107 = vld [vmem:[%s3 + $0x20] sm:$0xf]
    %v108 = vld [vmem:[%s3 + $0x24] sm:$0xf]
    %v109 = vld [vmem:[%s3 + $0x28] sm:$0xf]
    %v110 = vld [vmem:[%s3 + $0x2c] sm:$0xf]
    %v111 = vld [vmem:[%s3 + $0x30] sm:$0xf]
    %v112 = vld [vmem:[%s3 + $0x34] sm:$0xf]
    %v113 = vld [vmem:[%s3 + $0x38] sm:$0xf]
    %v114 = vld [vmem:[%s3 + $0x3c] sm:$0xf]
    %v115 = vld [vmem:[%s4] sm:$0x1]
    %v117 = vlaneseq
    %v118 = vshrl.u32 %v117, 7
    %v119 = vsub.s32 0, %v118
    %v120 = vrot.slane %v115, %v119
    %v138 = vunpack.c.l.b16 %v99
    %v139 = vunpack.c.l.b16 %v100
    %v140 = vunpack.c.l.b16 %v101
    %v141 = vunpack.c.l.b16 %v102
    %v142 = vunpack.c.l.b16 %v103
    %v143 = vunpack.c.l.b16 %v104
    %v144 = vunpack.c.l.b16 %v105
    %v145 = vunpack.c.l.b16 %v106
    %v146 = vunpack.c.l.b16 %v107
    %v147 = vunpack.c.l.b16 %v108
    %v148 = vunpack.c.l.b16 %v109
    %v149 = vunpack.c.l.b16 %v110
    %v150 = vunpack.c.l.b16 %v111
    %v151 = vunpack.c.l.b16 %v112
    %v152 = vunpack.c.l.b16 %v113
    %v153 = vunpack.c.l.b16 %v114
    %v154 = vpack.c.b16 %v139, %v138
    %v155 = vpack.c.b16 %v141, %v140
    %v156 = vpack.c.b16 %v143, %v142
    %v157 = vpack.c.b16 %v145, %v144
    %v158 = vpack.c.b16 %v147, %v146
    %v159 = vpack.c.b16 %v149, %v148
    %v160 = vpack.c.b16 %v151, %v150
    %v161 = vpack.c.b16 %v153, %v152
    %170 = vmatprep.subr.bf16.mxu0 0
    %171 = vmatpush1.bf16.msra.mxu0 %v154
    %172 = vmatprep.subr.bf16.mxu0 0
    %173 = vmatpush1.bf16.msra.mxu0 %v155
    %174 = vmatprep.subr.bf16.mxu0 0
    %175 = vmatpush1.bf16.msra.mxu0 %v156
    %176 = vmatprep.subr.bf16.mxu0 0
    %177 = vmatpush1.bf16.msra.mxu0 %v157
    %178 = vmatprep.subr.bf16.mxu0 0
    %179 = vmatpush1.bf16.msra.mxu0 %v158
    %180 = vmatprep.subr.bf16.mxu0 0
    %181 = vmatpush1.bf16.msra.mxu0 %v159
    %182 = vmatprep.subr.bf16.mxu0 0
    %183 = vmatpush1.bf16.msra.mxu0 %v160
    %184 = vmatprep.subr.bf16.mxu0 0
    %185 = vmatpush1.bf16.msra.mxu0 %v161
    %186 = vmatprep.subr.bf16.mxu0 0
    %187 = vmatpush1.bf16.msra.mxu0 0
    %188 = vmatprep.subr.bf16.mxu0 0
    %189 = vmatpush1.bf16.msra.mxu0 0
    %190 = vmatprep.subr.bf16.mxu0 0
    %191 = vmatpush1.bf16.msra.mxu0 0
    %192 = vmatprep.subr.bf16.mxu0 0
    %193 = vmatpush1.bf16.msra.mxu0 0
    %194 = vmatprep.subr.bf16.mxu0 0
    %195 = vmatpush1.bf16.msra.mxu0 0
    %196 = vmatprep.subr.bf16.mxu0 0
    %197 = vmatpush1.bf16.msra.mxu0 0
    %198 = vmatprep.subr.bf16.mxu0 0
    %199 = vmatpush1.bf16.msra.mxu0 0
    %200 = vmatprep.subr.bf16.mxu0 0
    %201 = vmatpush1.bf16.msra.mxu0 0
    %202 = vmatprep.mubr.bf16.mxu0 0
    %203 = vmatmul.mubr.bf16.gmra.mrb[0].mxu0 %v98
    %v204 = vpop.f32.mrb[0].mxu0
    %v205 = vadd.f32 %v120, %v204
    %v206 = vpop.f32.mrb[0].mxu0
    %v207 = vpop.f32.mrb[0].mxu0
    %v208 = vpop.f32.mrb[0].mxu0
    %209 = vdwg.mxu0
    %v210 = vmax.f32 %v205, 0.0
    %v211 = vld [vmem:[%s5] sm:$0xff]
    %v212 = vld [vmem:[%s5 + $0x8] sm:$0xff]
    %v213 = vld [vmem:[%s5 + $0x10] sm:$0xff]
    %v214 = vld [vmem:[%s5 + $0x18] sm:$0xff]
    %v215 = vld [vmem:[%s5 + $0x20] sm:$0xff]
    %v216 = vld [vmem:[%s5 + $0x28] sm:$0xff]
    %v217 = vld [vmem:[%s5 + $0x30] sm:$0xff]
    %v218 = vld [vmem:[%s5 + $0x38] sm:$0xff]
    %v219 = vld [vmem:[%s6] sm:$0x1]
    %v221 = vlaneseq
    %v222 = vshrl.u32 %v221, 7
    %v223 = vsub.s32 0, %v222
    %v224 = vrot.slane %v219, %v223
    %vm226 = vcmask 523264
    %v228 = vsel %vm226, %v210, 0
    %230 = vmatprep.subr.mxu0 0.0
    %231 = vmatpush1.msra.mxu0 %v211
    %232 = vmatprep.subr.mxu0 0.0
    %233 = vmatpush1.msra.mxu0 %v212
    %234 = vmatprep.subr.mxu0 0.0
    %235 = vmatpush1.msra.mxu0 %v213
    %236 = vmatprep.subr.mxu0 0.0
    %237 = vmatpush1.msra.mxu0 %v214
    %238 = vmatprep.subr.mxu0 0.0
    %239 = vmatpush1.msra.mxu0 %v215
    %240 = vmatprep.subr.mxu0 0.0
    %241 = vmatpush1.msra.mxu0 %v216
    %242 = vmatprep.subr.mxu0 0.0
    %243 = vmatpush1.msra.mxu0 %v217
    %244 = vmatprep.subr.mxu0 0.0
    %245 = vmatpush1.msra.mxu0 %v218
    %246 = vmatprep.subr.mxu0 0.0
    %247 = vmatpush1.msra.mxu0 0.0
    %248 = vmatprep.subr.mxu0 0.0
    %249 = vmatpush1.msra.mxu0 0.0
    %250 = vmatprep.subr.mxu0 0.0
    %251 = vmatpush1.msra.mxu0 0.0
    %252 = vmatprep.subr.mxu0 0.0
    %253 = vmatpush1.msra.mxu0 0.0
    %254 = vmatprep.subr.mxu0 0.0
    %255 = vmatpush1.msra.mxu0 0.0
    %256 = vmatprep.subr.mxu0 0.0
    %257 = vmatpush1.msra.mxu0 0.0
    %258 = vmatprep.subr.mxu0 0.0
    %259 = vmatpush1.msra.mxu0 0.0
    %260 = vmatprep.subr.mxu0 0.0
    %261 = vmatpush1.msra.mxu0 0.0
    %262 = vmatprep.subr.mxu0 0.0
    %263 = vmatpush1.msra.mxu0 0.0
    %264 = vmatprep.subr.mxu0 0.0
    %265 = vmatpush1.msra.mxu0 0.0
    %266 = vmatprep.subr.mxu0 0.0
    %267 = vmatpush1.msra.mxu0 0.0
    %268 = vmatprep.subr.mxu0 0.0
    %269 = vmatpush1.msra.mxu0 0.0
    %270 = vmatprep.subr.mxu0 0.0
    %271 = vmatpush1.msra.mxu0 0.0
    %272 = vmatprep.subr.mxu0 0.0
    %273 = vmatpush1.msra.mxu0 0.0
    %274 = vmatprep.subr.mxu0 0.0
    %275 = vmatpush1.msra.mxu0 0.0
    %276 = vmatprep.subr.mxu0 0.0
    %277 = vmatpush1.msra.mxu0 0.0
    %278 = vmatprep.subr.mxu0 0.0
    %279 = vmatpush1.msra.mxu0 0.0
    %280 = vmatprep.subr.mxu0 0.0
    %281 = vmatpush1.msra.mxu0 0.0
    %282 = vmatprep.subr.mxu0 0.0
    %283 = vmatpush1.msra.mxu0 0.0
    %284 = vmatprep.subr.mxu0 0.0
    %285 = vmatpush1.msra.mxu0 0.0
    %286 = vmatprep.subr.mxu0 0.0
    %287 = vmatpush1.msra.mxu0 0.0
    %288 = vmatprep.subr.mxu0 0.0
    %289 = vmatpush1.msra.mxu0 0.0
    %290 = vmatprep.subr.mxu0 0.0
    %291 = vmatpush1.msra.mxu0 0.0
    %292 = vmatprep.subr.mxu0 0.0
    %293 = vmatpush1.msra.mxu0 0.0
    %294 = vmatprep.mubr.f32.mxu0 0.0
    %295 = vmatmul.mubr.f32.gmra.mrb[0].mxu0 %v228
    %v296 = vpop.f32.mrb[0].mxu0
    %v297 = vadd.f32 %v224, %v296
    %v298 = vpop.f32.mrb[0].mxu0
    %299 = vdwg.mxu0
    %vm300 = vcmask 64512
    %301 = vst.msk [vmem:[#allocation2] sm:$0xff] %vm300, %v297
    // Predicated region
    $region30: #{motor_fault_nn_forward.1} parent=1 // pred_check
      _
    $region31: #{motor_fault_nn_forward.1} parent=1 // pred_check_branch
      %303 = sbr.rel (0) target = $region33
    $region32: #{motor_fault_nn_forward.1} parent=1 // pred_region
      %s305 = ssub.s32 128, 128
      %306 = vsyncadd [#allocation3], %s305
      %s308 = sshll.u32 [#allocation2], 4
      %s309 = int_to_ptr.vmem [resolvable:$true] %s308
      %311 = dma.vmem_to_hbm [thread:$0]  %s309, 128, %s7, [#allocation3]
    $region33: #{motor_fault_nn_forward.1} parent=1 // pred_fallthru
      _
    // Predicated region
    $region34: #{motor_fault_nn_forward.1} parent=1 // pred_check
      _
    $region35: #{motor_fault_nn_forward.1} parent=1 // pred_check_branch
      %313 = sbr.rel (0) target = $region37
    $region36: #{motor_fault_nn_forward.1} parent=1 // pred_region
      %314 = dma.done [#allocation3], 128
    $region37: #{motor_fault_nn_forward.1} parent=1 // pred_fallthru
      _
    %315 = vsyncpa [#allocation3], 1

</llo_original>
